<compile_context>
chip_gen: v7x
topology: tpu7x:2x2x1
jax: 0.10.0
libtpu: 0.0.40
codegen_flags: <defaults>
</compile_context>

<pallas_src>
import numpy as np

import jax
import jax.numpy as jnp
from jax.experimental import pallas as pl
from jax.experimental.pallas import tpu as pltpu


def _round_up(x: int, m: int) -> int:
    return ((x + m - 1) // m) * m


def _contrastive_matrix(n_gen: int) -> jnp.ndarray:
    """Deterministic +1/-1 pairwise-contrast matrix, identical to the torch version."""
    cu = n_gen * (n_gen - 1) // 2
    cm = np.zeros((n_gen, cu), dtype=np.float32)
    p, s = 0, 1
    for i in range(cu):
        cm[p, i] = 1.0
        cm[s, i] = -1.0
        if s == n_gen - 1:
            p += 1
            s = p
        s += 1
    return jnp.asarray(cm)


def _htmn_head_kernel(ll_ref, cm_ref, wt_ref, o_ref):
    # c_neurons = tanh(log_likelihood @ contrastive)   -> MXU + EUP (tanh)
    c = jnp.tanh(
        jnp.dot(ll_ref[...], cm_ref[...], preferred_element_type=jnp.float32)
    )
    # out = c_neurons @ W^T  (Linear, no bias; W pre-transposed at model init)
    o_ref[...] = jnp.dot(c, wt_ref[...], preferred_element_type=jnp.float32).astype(
        o_ref.dtype
    )


def _choose_batch_tile(B: int) -> int:
    """Batch tile: large (amortizes per-step overhead) but always >= 2 grid
    steps for non-trivial B so v7x can shard the batch across its 2 TCs."""
    if B <= 8:
        return B  # single full-extent block; legal for any B (block == array dim)
    return min(4096, _round_up(-(-B // 2), 8))


def htmn_head_forward(log_likelihood: jnp.ndarray,
                      contrastive: jnp.ndarray,
                      w_t: jnp.ndarray) -> jnp.ndarray:
    """HTMN classification head.

    log_likelihood: [B, n_gen]  (output of the HTMM, f32)
    contrastive:    [n_gen, CU] fixed +1/-1 contrast matrix (prepared once)
    w_t:            [CU, OUT]   nn.Linear(CU, OUT, bias=False).weight.T (prepared once)
    returns:        [B, OUT]    f32
    """
    B, n_gen = log_likelihood.shape
    cu, out_dim = w_t.shape
    assert contrastive.shape == (n_gen, cu)

    tb = _choose_batch_tile(B)
    grid = (pl.cdiv(B, tb),)

    return pl.pallas_call(
        _htmn_head_kernel,
        out_shape=jax.ShapeDtypeStruct((B, out_dim), jnp.float32),
        grid_spec=pltpu.PrefetchScalarGridSpec(
            num_scalar_prefetch=0,
            grid=grid,
            in_specs=[
                # Batch-tiled log-likelihood (auto double-buffered by Pallas).
                # Last dim == full array dim, so no lane constraint applies and
                # each block is one contiguous HBM region.
                pl.BlockSpec((tb, n_gen), lambda i: (i, 0)),
                # Constant operands: same block every step -> stay VMEM-resident.
                pl.BlockSpec((n_gen, cu), lambda i: (0, 0)),
                pl.BlockSpec((cu, out_dim), lambda i: (0, 0)),
            ],
            # OUT is unpadded: block last dim == full array dim (10), so the
            # writeback is exactly 40 B/row and contiguous in HBM.
            out_specs=pl.BlockSpec((tb, out_dim), lambda i: (i, 0)),
        ),
        compiler_params=pltpu.CompilerParams(
            # Batch axis is independent -> shardable across TCs on v7x.
            dimension_semantics=("parallel",),
        ),
    )(log_likelihood.astype(jnp.float32), contrastive, w_t)


if __name__ == "__main__":
    # Small, module-consistent shapes.
    B = 8          # number of trees in the batch
    N_GEN = 16     # generative models in the HTMM mixture
    OUT = 10       # classifier output dim
    CU = N_GEN * (N_GEN - 1) // 2  # 120 contrastive units

    key = jax.random.PRNGKey(0)
    k_ll, k_w, k_ll2 = jax.random.split(key, 3)

    # Stand-in for HTMM output (log-likelihoods are negative-ish floats).
    log_likelihood = -jnp.abs(jax.random.normal(k_ll, (B, N_GEN), dtype=jnp.float32))

    # --- "Model init": constants prepared exactly once, not per forward call ---
    contrastive = _contrastive_matrix(N_GEN)                    # [N_GEN, CU]
    # nn.Linear(CU, OUT, bias=False).weight has shape [OUT, CU]; pre-transpose.
    w_out = jax.random.normal(k_w, (OUT, CU), dtype=jnp.float32) * (1.0 / jnp.sqrt(CU))
    w_t = jnp.asarray(w_out.T)                                  # [CU, OUT]

    # Small-batch case (single grid step).
    out = jax.block_until_ready(htmn_head_forward(log_likelihood, contrastive, w_t))
    ref = jnp.tanh(log_likelihood @ contrastive) @ w_out.T
    assert out.shape == (B, OUT)
    assert jnp.allclose(out, ref, atol=1e-5, rtol=1e-5), "mismatch vs reference (small B)"

    # Larger batch exercising the multi-step grid + ragged last block
    # (B2 is neither a multiple of the tile nor of 8 — no wrapper pad/slice).
    B2 = 1037
    ll2 = -jnp.abs(jax.random.normal(k_ll2, (B2, N_GEN), dtype=jnp.float32))
    out2 = jax.block_until_ready(htmn_head_forward(ll2, contrastive, w_t))
    ref2 = jnp.tanh(ll2 @ contrastive) @ w_out.T
    assert out2.shape == (B2, OUT)
    assert jnp.allclose(out2, ref2, atol=1e-5, rtol=1e-5), "mismatch vs reference (large B)"

    print("KERNEL_OK")
</pallas_src>

<mosaic_0001>
module attributes {stable_mosaic.version = 11 : i64} {
  func.func @_htmn_head_kernel(%arg0: i32, %arg1: memref<8x16xf32, #tpu.memory_space<vmem>>, %arg2: memref<16x120xf32, #tpu.memory_space<vmem>>, %arg3: memref<120x10xf32, #tpu.memory_space<vmem>>, %arg4: memref<8x10xf32, #tpu.memory_space<vmem>>) attributes {dimension_semantics = [#tpu.dimension_semantics<parallel>], iteration_bounds = array<i64: 1>, scalar_prefetch = 0 : i64, scratch_operands = 0 : i64, tpu.core_type = #tpu.core_type<tc>, window_params = [{transform_indices = @transform_0, window_bounds = array<i64: 8, 16>}, {pipeline_mode = #tpu.pipeline_mode<synchronous>, transform_indices = @transform_1, window_bounds = array<i64: 16, 120>}, {pipeline_mode = #tpu.pipeline_mode<synchronous>, transform_indices = @transform_2, window_bounds = array<i64: 120, 10>}, {transform_indices = @transform_3, window_bounds = array<i64: 8, 10>}]} {
    %c0 = arith.constant 0 : index
    %c0_0 = arith.constant 0 : index
    %0 = vector.load %arg1[%c0, %c0_0] : memref<8x16xf32, #tpu.memory_space<vmem>>, vector<8x16xf32>
    %c0_1 = arith.constant 0 : index
    %c0_2 = arith.constant 0 : index
    %1 = vector.load %arg2[%c0_1, %c0_2] : memref<16x120xf32, #tpu.memory_space<vmem>>, vector<16x120xf32>
    %cst = arith.constant dense<0.000000e+00> : vector<8x120xf32>
    %2 = tpu.matmul %0, %1, %cst {dimension_numbers = #tpu.dot_dimension_numbers<[1], [0], [0], [1], [0, 0, 1, 1], [], []>} : vector<8x16xf32>, vector<16x120xf32>, vector<8x120xf32> -> vector<8x120xf32>
    %3 = math.tanh %2 : vector<8x120xf32>
    %c0_3 = arith.constant 0 : index
    %c0_4 = arith.constant 0 : index
    %4 = vector.load %arg3[%c0_3, %c0_4] : memref<120x10xf32, #tpu.memory_space<vmem>>, vector<120x10xf32>
    %cst_5 = arith.constant dense<0.000000e+00> : vector<8x10xf32>
    %5 = tpu.matmul %3, %4, %cst_5 {dimension_numbers = #tpu.dot_dimension_numbers<[1], [0], [0], [1], [0, 0, 1, 1], [], []>} : vector<8x120xf32>, vector<120x10xf32>, vector<8x10xf32> -> vector<8x10xf32>
    %c0_6 = arith.constant 0 : index
    %c0_7 = arith.constant 0 : index
    %6 = vector.load %arg4[%c0_6, %c0_7] : memref<8x10xf32, #tpu.memory_space<vmem>>, vector<8x10xf32>
    tpu.vector_store %arg4[%c0_6, %c0_7], %5 {strides = array<i32>} : memref<8x10xf32, #tpu.memory_space<vmem>>, vector<8x10xf32>,
    return
  }
  func.func @transform_0(%arg0: i32) -> (i32, i32) {
    %c0_i32 = arith.constant 0 : i32
    %c0_i32_0 = arith.constant 0 : i32
    return %arg0, %c0_i32 : i32, i32
  }
  func.func @transform_1(%arg0: i32) -> (i32, i32) {
    %c0_i32 = arith.constant 0 : i32
    %c0_i32_0 = arith.constant 0 : i32
    %c0_i32_1 = arith.constant 0 : i32
    return %c0_i32, %c0_i32_0 : i32, i32
  }
  func.func @transform_2(%arg0: i32) -> (i32, i32) {
    %c0_i32 = arith.constant 0 : i32
    %c0_i32_0 = arith.constant 0 : i32
    %c0_i32_1 = arith.constant 0 : i32
    return %c0_i32, %c0_i32_0 : i32, i32
  }
  func.func @transform_3(%arg0: i32) -> (i32, i32) {
    %c0_i32 = arith.constant 0 : i32
    %c0_i32_0 = arith.constant 0 : i32
    return %arg0, %c0_i32 : i32, i32
  }
}

</mosaic_0001>

<llo_original>
// kernel: tpu_custom_call.1
$region0: #{tpu_custom_call.1}
  #allocation0 [shape = 'u32[]', space=smem, size = 0x4, offset = 0x4, fixed_abs, tag = 'smem constant byte address 0x4 - core index']
  #allocation1 [shape = 'u32[144,128]{1,0:T(1,128)}', space=vmem, size = 0x12000, scoped, tag = 'internal scratch']
  %s0 = inlined_call_operand.vmem [shape: f32[8,16], index: 0, kind: input, shape index: {}]
  %s1 = inlined_call_operand.vmem [shape: f32[16,120], index: 1, kind: input, shape index: {}]
  %s2 = inlined_call_operand.vmem [shape: f32[120,10], index: 2, kind: input, shape index: {}]
  %s3 = inlined_call_operand.hbm [shape: f32[8,10], index: 3, kind: output, shape index: {}]
  %s4 = sld [smem:[#allocation0]]
  $region22: #{tpu_custom_call.1} parent=0
    _
  %s6 = ssub.s32 1, %s4
  %s7 = scalar_select 0, %s6, %s4
  $region1: #{tpu_custom_call.1} parent=0
    #allocation2 [shape = 'u8[4096]{0}', space=vmem, size = 0x1000, scoped, tag = 'output window, operand 0, single buffered']
    #allocation3 [shape = 's32[1]{0}', space=sflag, size = 0x4, scoped, tag = 'scoped memory for tpu_custom_call.1']
    %8 = vsyncpa [#allocation3], 0
    // Predicated region
    $region2: #{tpu_custom_call.1} parent=1 // pred_check
      _
    $region3: #{tpu_custom_call.1} parent=1 // pred_check_branch
      %10 = sbr.rel (0) target = $region5
    $region4: #{tpu_custom_call.1} parent=1 // pred_region
      _
    $region5: #{tpu_custom_call.1} parent=1 // pred_fallthru
      _
    // Predicated region
    $region6: #{tpu_custom_call.1} parent=1 // pred_check
      _
    $region7: #{tpu_custom_call.1} parent=1 // pred_check_branch
      %12 = sbr.rel (0) target = $region9
    $region8: #{tpu_custom_call.1} parent=1 // pred_region
      _
    $region9: #{tpu_custom_call.1} parent=1 // pred_fallthru
      _
    // Predicated region
    $region10: #{tpu_custom_call.1} parent=1 // pred_check
      _
    $region11: #{tpu_custom_call.1} parent=1 // pred_check_branch
      %14 = sbr.rel (0) target = $region13
    $region12: #{tpu_custom_call.1} parent=1 // pred_region
      _
    $region13: #{tpu_custom_call.1} parent=1 // pred_fallthru
      _
    %v15 = vld [vmem:[%s0] sm:$0xff]
    %v16 = vld [vmem:[%s1] sm:$0xff]
    %v17 = vld [vmem:[%s1 + $0x8] sm:$0xff]
    %vm18 = vcmask 130048
    %v20 = vsel %vm18, %v15, 0
    %22 = vmatprep.subr.mxu0 0.0
    %23 = vmatpush1.msra.mxu0 %v16
    %24 = vmatprep.subr.mxu0 0.0
    %25 = vmatpush1.msra.mxu0 %v17
    %26 = vmatprep.subr.mxu0 0.0
    %27 = vmatpush1.msra.mxu0 0.0
    %28 = vmatprep.subr.mxu0 0.0
    %29 = vmatpush1.msra.mxu0 0.0
    %30 = vmatprep.subr.mxu0 0.0
    %31 = vmatpush1.msra.mxu0 0.0
    %32 = vmatprep.subr.mxu0 0.0
    %33 = vmatpush1.msra.mxu0 0.0
    %34 = vmatprep.subr.mxu0 0.0
    %35 = vmatpush1.msra.mxu0 0.0
    %36 = vmatprep.subr.mxu0 0.0
    %37 = vmatpush1.msra.mxu0 0.0
    %38 = vmatprep.subr.mxu0 0.0
    %39 = vmatpush1.msra.mxu0 0.0
    %40 = vmatprep.subr.mxu0 0.0
    %41 = vmatpush1.msra.mxu0 0.0
    %42 = vmatprep.subr.mxu0 0.0
    %43 = vmatpush1.msra.mxu0 0.0
    %44 = vmatprep.subr.mxu0 0.0
    %45 = vmatpush1.msra.mxu0 0.0
    %46 = vmatprep.subr.mxu0 0.0
    %47 = vmatpush1.msra.mxu0 0.0
    %48 = vmatprep.subr.mxu0 0.0
    %49 = vmatpush1.msra.mxu0 0.0
    %50 = vmatprep.subr.mxu0 0.0
    %51 = vmatpush1.msra.mxu0 0.0
    %52 = vmatprep.subr.mxu0 0.0
    %53 = vmatpush1.msra.mxu0 0.0
    %54 = vmatprep.subr.mxu0 0.0
    %55 = vmatpush1.msra.mxu0 0.0
    %56 = vmatprep.subr.mxu0 0.0
    %57 = vmatpush1.msra.mxu0 0.0
    %58 = vmatprep.subr.mxu0 0.0
    %59 = vmatpush1.msra.mxu0 0.0
    %60 = vmatprep.subr.mxu0 0.0
    %61 = vmatpush1.msra.mxu0 0.0
    %62 = vmatprep.subr.mxu0 0.0
    %63 = vmatpush1.msra.mxu0 0.0
    %64 = vmatprep.subr.mxu0 0.0
    %65 = vmatpush1.msra.mxu0 0.0
    %66 = vmatprep.subr.mxu0 0.0
    %67 = vmatpush1.msra.mxu0 0.0
    %68 = vmatprep.subr.mxu0 0.0
    %69 = vmatpush1.msra.mxu0 0.0
    %70 = vmatprep.subr.mxu0 0.0
    %71 = vmatpush1.msra.mxu0 0.0
    %72 = vmatprep.subr.mxu0 0.0
    %73 = vmatpush1.msra.mxu0 0.0
    %74 = vmatprep.subr.mxu0 0.0
    %75 = vmatpush1.msra.mxu0 0.0
    %76 = vmatprep.subr.mxu0 0.0
    %77 = vmatpush1.msra.mxu0 0.0
    %78 = vmatprep.subr.mxu0 0.0
    %79 = vmatpush1.msra.mxu0 0.0
    %80 = vmatprep.subr.mxu0 0.0
    %81 = vmatpush1.msra.mxu0 0.0
    %82 = vmatprep.subr.mxu0 0.0
    %83 = vmatpush1.msra.mxu0 0.0
    %84 = vmatprep.subr.mxu0 0.0
    %85 = vmatpush1.msra.mxu0 0.0
    %86 = vmatprep.mubr.f32.mxu0 0.0
    %87 = vmatmul.mubr.f32.gmra.mrb[0].mxu0 %v20
    %v88 = vpop.f32.mrb[0].mxu0
    %v89 = vadd.f32 0.0, %v88
    %v90 = vpop.f32.mrb[0].mxu0
    %91 = vdwg.mxu0
    %v92 = vtanh.pop %v89
    %v93 = vld [vmem:[%s2] sm:$0xff]
    %v94 = vld [vmem:[%s2 + $0x8] sm:$0xff]
    %v95 = vld [vmem:[%s2 + $0x10] sm:$0xff]
    %v96 = vld [vmem:[%s2 + $0x18] sm:$0xff]
    %v97 = vld [vmem:[%s2 + $0x20] sm:$0xff]
    %v98 = vld [vmem:[%s2 + $0x28] sm:$0xff]
    %v99 = vld [vmem:[%s2 + $0x30] sm:$0xff]
    %v100 = vld [vmem:[%s2 + $0x38] sm:$0xff]
    %v101 = vld [vmem:[%s2 + $0x40] sm:$0xff]
    %v102 = vld [vmem:[%s2 + $0x48] sm:$0xff]
    %v103 = vld [vmem:[%s2 + $0x50] sm:$0xff]
    %v104 = vld [vmem:[%s2 + $0x58] sm:$0xff]
    %v105 = vld [vmem:[%s2 + $0x60] sm:$0xff]
    %v106 = vld [vmem:[%s2 + $0x68] sm:$0xff]
    %v107 = vld [vmem:[%s2 + $0x70] sm:$0xff]
    %vm108 = vcmask 982016
    %v110 = vsel %vm108, %v92, 0
    %112 = vmatprep.subr.mxu0 0.0
    %113 = vmatpush1.msra.mxu0 %v93
    %114 = vmatprep.subr.mxu0 0.0
    %115 = vmatpush1.msra.mxu0 %v94
    %116 = vmatprep.subr.mxu0 0.0
    %117 = vmatpush1.msra.mxu0 %v95
    %118 = vmatprep.subr.mxu0 0.0
    %119 = vmatpush1.msra.mxu0 %v96
    %120 = vmatprep.subr.mxu0 0.0
    %121 = vmatpush1.msra.mxu0 %v97
    %122 = vmatprep.subr.mxu0 0.0
    %123 = vmatpush1.msra.mxu0 %v98
    %124 = vmatprep.subr.mxu0 0.0
    %125 = vmatpush1.msra.mxu0 %v99
    %126 = vmatprep.subr.mxu0 0.0
    %127 = vmatpush1.msra.mxu0 %v100
    %128 = vmatprep.subr.mxu0 0.0
    %129 = vmatpush1.msra.mxu0 %v101
    %130 = vmatprep.subr.mxu0 0.0
    %131 = vmatpush1.msra.mxu0 %v102
    %132 = vmatprep.subr.mxu0 0.0
    %133 = vmatpush1.msra.mxu0 %v103
    %134 = vmatprep.subr.mxu0 0.0
    %135 = vmatpush1.msra.mxu0 %v104
    %136 = vmatprep.subr.mxu0 0.0
    %137 = vmatpush1.msra.mxu0 %v105
    %138 = vmatprep.subr.mxu0 0.0
    %139 = vmatpush1.msra.mxu0 %v106
    %140 = vmatprep.subr.mxu0 0.0
    %141 = vmatpush1.msra.mxu0 %v107
    %142 = vmatprep.subr.mxu0 0.0
    %143 = vmatpush1.msra.mxu0 0.0
    %144 = vmatprep.subr.mxu0 0.0
    %145 = vmatpush1.msra.mxu0 0.0
    %146 = vmatprep.subr.mxu0 0.0
    %147 = vmatpush1.msra.mxu0 0.0
    %148 = vmatprep.subr.mxu0 0.0
    %149 = vmatpush1.msra.mxu0 0.0
    %150 = vmatprep.subr.mxu0 0.0
    %151 = vmatpush1.msra.mxu0 0.0
    %152 = vmatprep.subr.mxu0 0.0
    %153 = vmatpush1.msra.mxu0 0.0
    %154 = vmatprep.subr.mxu0 0.0
    %155 = vmatpush1.msra.mxu0 0.0
    %156 = vmatprep.subr.mxu0 0.0
    %157 = vmatpush1.msra.mxu0 0.0
    %158 = vmatprep.subr.mxu0 0.0
    %159 = vmatpush1.msra.mxu0 0.0
    %160 = vmatprep.subr.mxu0 0.0
    %161 = vmatpush1.msra.mxu0 0.0
    %162 = vmatprep.subr.mxu0 0.0
    %163 = vmatpush1.msra.mxu0 0.0
    %164 = vmatprep.subr.mxu0 0.0
    %165 = vmatpush1.msra.mxu0 0.0
    %166 = vmatprep.subr.mxu0 0.0
    %167 = vmatpush1.msra.mxu0 0.0
    %168 = vmatprep.subr.mxu0 0.0
    %169 = vmatpush1.msra.mxu0 0.0
    %170 = vmatprep.subr.mxu0 0.0
    %171 = vmatpush1.msra.mxu0 0.0
    %172 = vmatprep.subr.mxu0 0.0
    %173 = vmatpush1.msra.mxu0 0.0
    %174 = vmatprep.subr.mxu0 0.0
    %175 = vmatpush1.msra.mxu0 0.0
    %176 = vmatprep.mubr.f32.mxu0 0.0
    %177 = vmatmul.mubr.f32.gmra.mrb[0].mxu0 %v110
    %v178 = vpop.f32.mrb[0].mxu0
    %v179 = vadd.f32 0.0, %v178
    %v180 = vpop.f32.mrb[0].mxu0
    %181 = vdwg.mxu0
    %vm182 = vcmask 80896
    %183 = vst.msk [vmem:[#allocation2] sm:$0xff] %vm182, %v179
    // Predicated region
    $region14: #{tpu_custom_call.1} parent=1 // pred_check
      _
    $region15: #{tpu_custom_call.1} parent=1 // pred_check_branch
      %185 = sbr.rel (0) target = $region17
    $region16: #{tpu_custom_call.1} parent=1 // pred_region
      %s187 = ssub.s32 128, 128
      %188 = vsyncadd [#allocation3], %s187
      %s190 = sshll.u32 [#allocation2], 4
      %s191 = int_to_ptr.vmem [resolvable:$true] %s190
      %193 = dma.vmem_to_hbm [thread:$0]  %s191, 128, %s3, [#allocation3]
    $region17: #{tpu_custom_call.1} parent=1 // pred_fallthru
      _
    // Predicated region
    $region18: #{tpu_custom_call.1} parent=1 // pred_check
      _
    $region19: #{tpu_custom_call.1} parent=1 // pred_check_branch
      %195 = sbr.rel (0) target = $region21
    $region20: #{tpu_custom_call.1} parent=1 // pred_region
      %196 = dma.done [#allocation3], 128
    $region21: #{tpu_custom_call.1} parent=1 // pred_fallthru
      _
    %197 = vsyncpa [#allocation3], 1

</llo_original>
